<compile_context>
chip_gen: v7x
topology: tpu7x:2x2x1
jax: 0.10.0
libtpu: 0.0.40
codegen_flags: <defaults>
</compile_context>

<pallas_src>
import jax
import jax.numpy as jnp
from jax.experimental import pallas as pl
from jax.experimental.pallas import tpu as pltpu


def _round_up(x, m):
    return (x + m - 1) // m * m


def _fusion_kernel(w_ref, v1_ref, v2_ref, v3_ref, o_ref):
    # w_ref : (1, D)   attention weight row (broadcast over batch sublanes)
    # v*_ref: (tb, D)  batch tile of each input vector
    # o_ref : (tb, D)  fused output tile
    #
    # NOTE: the last grid step may be a partial batch block.  Rows past B hold
    # uninitialized VMEM and can produce inf/NaN through exp(), but their
    # stores are masked by Pallas, so they never reach HBM (correctness-safe).
    v1 = v1_ref[...]
    v2 = v2_ref[...]
    v3 = v3_ref[...]
    w = w_ref[...].astype(jnp.float32)

    # Per-row scores <v_i, w> in f32 -> (tb, 1). VPU multiply + XLU lane reduce.
    s1 = jnp.sum(v1 * w, axis=-1, keepdims=True)
    s2 = jnp.sum(v2 * w, axis=-1, keepdims=True)
    s3 = jnp.sum(v3 * w, axis=-1, keepdims=True)

    # Numerically-stable softmax over the 3 stacked vectors (dim=1 in torch).
    m = jnp.maximum(jnp.maximum(s1, s2), s3)
    e1 = jnp.exp(s1 - m)
    e2 = jnp.exp(s2 - m)
    e3 = jnp.exp(s3 - m)
    inv_denom = pl.reciprocal(e1 + e2 + e3, approx=False)  # EUP slot, off crit path

    # Pre-scale the (tb, 1) attention weights so only three full-width
    # multiply-adds touch (tb, D) data; keep them in the vector dtype so bf16
    # inputs stay bf16 on the VPU (v6e/v7x).
    a1 = (e1 * inv_denom).astype(v1.dtype)
    a2 = (e2 * inv_denom).astype(v1.dtype)
    a3 = (e3 * inv_denom).astype(v1.dtype)
    o_ref[...] = (a1 * v1 + a2 * v2 + a3 * v3).astype(o_ref.dtype)


_MAX_TB = 4096  # rows; 4096 x 512 f32 x 8 buffers == 64 MiB workset


def _vmem_capacity_bytes():
    """Trace-time VMEM capacity query with a conservative (64 MiB) fallback."""
    try:
        cap = getattr(pltpu.get_tpu_info(), "vmem_capacity_bytes", None)
        if cap:
            return int(cap)
    except Exception:
        pass
    return 64 << 20


def attention_fusion_3d(v1, v2, v3, w):
    """v1, v2, v3: (B, D); w: (1, D). Returns (B, D) in the input dtype."""
    B, D = v1.shape
    assert v2.shape == (B, D) and v3.shape == (B, D) and w.shape == (1, D)
    out_dtype = v1.dtype
    itemsize = jnp.dtype(out_dtype).itemsize

    # Generation-aware VMEM policy: tight on 64 MiB-per-TC parts (v7x, where
    # each TC holds its own double-buffered tiles), roomy on 128 MiB parts.
    vmem_cap = _vmem_capacity_bytes()
    if vmem_cap <= (64 << 20):
        workset_budget = 24 << 20
        vmem_limit_cap = 48 << 20
    else:
        workset_budget = 64 << 20
        vmem_limit_cap = 96 << 20

    # Double-buffered working set: 4 full (tb, D) tiles (3 inputs + 1 output)
    # x 2 buffers, plus the tiny (1, D) weight buffer.
    row_bytes = 4 * 2 * D * itemsize
    tb_cap = max(8, min(_MAX_TB, (workset_budget - 2 * D * itemsize) // row_bytes))
    tb = 8
    while tb * 2 <= tb_cap:
        tb *= 2
    # Keep >= ~4 grid steps so DMA overlaps compute and both v7x TCs get work.
    tb = max(8, min(tb, _round_up(max(1, pl.cdiv(B, 4)), 8)))

    grid = (pl.cdiv(B, tb),)  # ragged last block handled by masked stores
    vec_spec = pl.BlockSpec((tb, D), lambda i: (i, 0))  # full-extent lane dim
    w_spec = pl.BlockSpec((1, D), lambda i: (0, 0))

    work_bytes = (4 * 2 * tb * D + 2 * D) * itemsize
    vmem_limit = int(min(vmem_limit_cap, max(32 << 20, work_bytes + (8 << 20))))

    cost = pl.CostEstimate(
        flops=int(10 * B * D),
        transcendentals=int(4 * B),
        bytes_accessed=int((4 * B * D + D) * itemsize),
    )

    # TODO(synk): if v7x profiling shows exposed per-step DMA, sweep
    # pipeline_mode=pl.Buffered(3) on the vector in_specs (fits the 24 MiB budget).
    return pl.pallas_call(
        _fusion_kernel,
        out_shape=jax.ShapeDtypeStruct((B, D), out_dtype),
        grid_spec=pltpu.PrefetchScalarGridSpec(
            num_scalar_prefetch=0,
            grid=grid,
            in_specs=[w_spec, vec_spec, vec_spec, vec_spec],
            out_specs=vec_spec,
        ),
        compiler_params=pltpu.CompilerParams(
            dimension_semantics=("parallel",),  # megacore-shardable on v7x
            vmem_limit_bytes=vmem_limit,
        ),
        cost_estimate=cost,
    )(w, v1, v2, v3)


def attention_fusion_3d_ref(v1, v2, v3, w):
    """Pure-JAX reference mirroring the PyTorch forward exactly (VPU-path scores
    to avoid MXU default-precision noise in the comparison)."""
    stacked = jnp.stack([v1, v2, v3], axis=1)                  # (B, 3, D)
    scores = jnp.sum(stacked * w[0][None, None, :], axis=-1)   # Linear(D,1,bias=False)
    alpha = jax.nn.softmax(scores, axis=1)                     # softmax over the 3 vectors
    return alpha[:, 0:1] * v1 + alpha[:, 1:2] * v2 + alpha[:, 2:3] * v3


if __name__ == "__main__":
    key = jax.random.PRNGKey(0)

    def _make_inputs(B, D, key):
        k1, k2, k3, kw = jax.random.split(key, 4)
        v1 = jax.random.normal(k1, (B, D), dtype=jnp.float32)
        v2 = jax.random.normal(k2, (B, D), dtype=jnp.float32)
        v3 = jax.random.normal(k3, (B, D), dtype=jnp.float32)
        # Deterministic init of nn.Linear(D, 1, bias=False) weight: (1, D).
        w = (jax.random.uniform(kw, (1, D), dtype=jnp.float32) - 0.5) * (
            2.0 / jnp.sqrt(D)
        )
        return v1, v2, v3, w

    TOL = 1e-4  # exact reciprocal -> only reduction-order noise remains

    ka, kb = jax.random.split(key)

    # Case 1: module default feature dim (512), small aligned batch.
    v1, v2, v3, w = _make_inputs(8, 512, ka)
    out = jax.block_until_ready(attention_fusion_3d(v1, v2, v3, w))
    ref = attention_fusion_3d_ref(v1, v2, v3, w)
    assert out.shape == (8, 512)
    assert jnp.allclose(out, ref, atol=TOL, rtol=TOL), "mismatch vs reference (aligned)"

    # Case 2: ragged batch + non-128-multiple feature dim exercises the masked
    # last batch block and the full-extent lane dimension (no padding anywhere).
    v1, v2, v3, w = _make_inputs(10, 200, kb)
    out = jax.block_until_ready(attention_fusion_3d(v1, v2, v3, w))
    ref = attention_fusion_3d_ref(v1, v2, v3, w)
    assert out.shape == (10, 200)
    assert jnp.allclose(out, ref, atol=TOL, rtol=TOL), "mismatch vs reference (ragged)"

    print("KERNEL_OK")
</pallas_src>

<mosaic_0001>
module attributes {stable_mosaic.version = 11 : i64} {
  func.func @_fusion_kernel(%arg0: i32, %arg1: memref<1x512xf32, #tpu.memory_space<vmem>>, %arg2: memref<8x512xf32, #tpu.memory_space<vmem>>, %arg3: memref<8x512xf32, #tpu.memory_space<vmem>>, %arg4: memref<8x512xf32, #tpu.memory_space<vmem>>, %arg5: memref<8x512xf32, #tpu.memory_space<vmem>>) attributes {dimension_semantics = [#tpu.dimension_semantics<parallel>], iteration_bounds = array<i64: 1>, scalar_prefetch = 0 : i64, scratch_operands = 0 : i64, tpu.core_type = #tpu.core_type<tc>, window_params = [{pipeline_mode = #tpu.pipeline_mode<synchronous>, transform_indices = @transform_0, window_bounds = array<i64: 1, 512>}, {transform_indices = @transform_1, window_bounds = array<i64: 8, 512>}, {transform_indices = @transform_2, window_bounds = array<i64: 8, 512>}, {transform_indices = @transform_3, window_bounds = array<i64: 8, 512>}, {transform_indices = @transform_4, window_bounds = array<i64: 8, 512>}]} {
    %c0 = arith.constant 0 : index
    %c0_0 = arith.constant 0 : index
    %0 = vector.load %arg2[%c0, %c0_0] : memref<8x512xf32, #tpu.memory_space<vmem>>, vector<8x512xf32>
    %c0_1 = arith.constant 0 : index
    %c0_2 = arith.constant 0 : index
    %1 = vector.load %arg3[%c0_1, %c0_2] : memref<8x512xf32, #tpu.memory_space<vmem>>, vector<8x512xf32>
    %c0_3 = arith.constant 0 : index
    %c0_4 = arith.constant 0 : index
    %2 = vector.load %arg4[%c0_3, %c0_4] : memref<8x512xf32, #tpu.memory_space<vmem>>, vector<8x512xf32>
    %c0_5 = arith.constant 0 : index
    %c0_6 = arith.constant 0 : index
    %3 = vector.load %arg1[%c0_5, %c0_6] : memref<1x512xf32, #tpu.memory_space<vmem>>, vector<1x512xf32>
    %4 = vector.broadcast %3 : vector<1x512xf32> to vector<8x512xf32>
    %5 = arith.mulf %0, %4 : vector<8x512xf32>
    %cst = arith.constant dense<0.000000e+00> : vector<8xf32>
    %6 = vector.multi_reduction <add>, %5, %cst [1] : vector<8x512xf32> to vector<8xf32>
    %7 = vector.shape_cast %6 : vector<8xf32> to vector<8x1xf32>
    %8 = vector.broadcast %3 : vector<1x512xf32> to vector<8x512xf32>
    %9 = arith.mulf %1, %8 : vector<8x512xf32>
    %cst_7 = arith.constant dense<0.000000e+00> : vector<8xf32>
    %10 = vector.multi_reduction <add>, %9, %cst_7 [1] : vector<8x512xf32> to vector<8xf32>
    %11 = vector.shape_cast %10 : vector<8xf32> to vector<8x1xf32>
    %12 = vector.broadcast %3 : vector<1x512xf32> to vector<8x512xf32>
    %13 = arith.mulf %2, %12 : vector<8x512xf32>
    %cst_8 = arith.constant dense<0.000000e+00> : vector<8xf32>
    %14 = vector.multi_reduction <add>, %13, %cst_8 [1] : vector<8x512xf32> to vector<8xf32>
    %15 = vector.shape_cast %14 : vector<8xf32> to vector<8x1xf32>
    %16 = arith.maximumf %7, %11 : vector<8x1xf32>
    %17 = arith.maximumf %16, %15 : vector<8x1xf32>
    %18 = arith.subf %7, %17 : vector<8x1xf32>
    %19 = math.exp %18 : vector<8x1xf32>
    %20 = arith.subf %11, %17 : vector<8x1xf32>
    %21 = math.exp %20 : vector<8x1xf32>
    %22 = arith.subf %15, %17 : vector<8x1xf32>
    %23 = math.exp %22 : vector<8x1xf32>
    %24 = arith.addf %19, %21 : vector<8x1xf32>
    %25 = arith.addf %24, %23 : vector<8x1xf32>
    %26 = tpu.reciprocal %25 : vector<8x1xf32> -> vector<8x1xf32>
    %27 = arith.mulf %19, %26 : vector<8x1xf32>
    %28 = arith.mulf %21, %26 : vector<8x1xf32>
    %29 = arith.mulf %23, %26 : vector<8x1xf32>
    %30 = vector.broadcast %27 : vector<8x1xf32> to vector<8x512xf32>
    %31 = arith.mulf %30, %0 : vector<8x512xf32>
    %32 = vector.broadcast %28 : vector<8x1xf32> to vector<8x512xf32>
    %33 = arith.mulf %32, %1 : vector<8x512xf32>
    %34 = arith.addf %31, %33 : vector<8x512xf32>
    %35 = vector.broadcast %29 : vector<8x1xf32> to vector<8x512xf32>
    %36 = arith.mulf %35, %2 : vector<8x512xf32>
    %37 = arith.addf %34, %36 : vector<8x512xf32>
    %c0_9 = arith.constant 0 : index
    %c0_10 = arith.constant 0 : index
    %38 = vector.load %arg5[%c0_9, %c0_10] : memref<8x512xf32, #tpu.memory_space<vmem>>, vector<8x512xf32>
    tpu.vector_store %arg5[%c0_9, %c0_10], %37 {strides = array<i32>} : memref<8x512xf32, #tpu.memory_space<vmem>>, vector<8x512xf32>,
    return
  }
  func.func @transform_0(%arg0: i32) -> (i32, i32) {
    %c0_i32 = arith.constant 0 : i32
    %c0_i32_0 = arith.constant 0 : i32
    %c0_i32_1 = arith.constant 0 : i32
    return %c0_i32, %c0_i32_0 : i32, i32
  }
  func.func @transform_1(%arg0: i32) -> (i32, i32) {
    %c0_i32 = arith.constant 0 : i32
    %c0_i32_0 = arith.constant 0 : i32
    return %arg0, %c0_i32 : i32, i32
  }
  func.func @transform_2(%arg0: i32) -> (i32, i32) {
    %c0_i32 = arith.constant 0 : i32
    %c0_i32_0 = arith.constant 0 : i32
    return %arg0, %c0_i32 : i32, i32
  }
  func.func @transform_3(%arg0: i32) -> (i32, i32) {
    %c0_i32 = arith.constant 0 : i32
    %c0_i32_0 = arith.constant 0 : i32
    return %arg0, %c0_i32 : i32, i32
  }
  func.func @transform_4(%arg0: i32) -> (i32, i32) {
    %c0_i32 = arith.constant 0 : i32
    %c0_i32_0 = arith.constant 0 : i32
    return %arg0, %c0_i32 : i32, i32
  }
}

</mosaic_0001>

<llo_original>
// kernel: tpu_custom_call.1
$region0: #{tpu_custom_call.1}
  #allocation0 [shape = 'u32[]', space=smem, size = 0x4, offset = 0x4, fixed_abs, tag = 'smem constant byte address 0x4 - core index']
  #allocation1 [shape = 'u32[144,128]{1,0:T(1,128)}', space=vmem, size = 0x12000, scoped, tag = 'internal scratch']
  %s0 = inlined_call_operand.hbm [shape: f32[1,512], index: 0, kind: input, shape index: {}]
  %s1 = inlined_call_operand.hbm [shape: f32[8,512], index: 1, kind: input, shape index: {}]
  %s2 = inlined_call_operand.hbm [shape: f32[8,512], index: 2, kind: input, shape index: {}]
  %s3 = inlined_call_operand.hbm [shape: f32[8,512], index: 3, kind: input, shape index: {}]
  %s4 = inlined_call_operand.hbm [shape: f32[8,512], index: 4, kind: output, shape index: {}]
  %s5 = sld [smem:[#allocation0]]
  $region42: #{tpu_custom_call.1} parent=0
    _
  %s7 = ssub.s32 1, %s5
  %s8 = scalar_select 0, %s7, %s5
  $region1: #{tpu_custom_call.1} parent=0
    #allocation2 [shape = 'u8[2048]{0}', space=vmem, size = 0x800, scoped, tag = 'input window, operand 0, single buffered']
    #allocation3 [shape = 's32[1]{0}', space=sflag, size = 0x4, scoped, tag = 'scoped memory for tpu_custom_call.1']
    #allocation4 [shape = 's32[1]{0}', space=sflag, size = 0x4, scoped, tag = 'scoped memory for tpu_custom_call.1']
    #allocation5 [shape = 'u8[16384]{0}', space=vmem, size = 0x4000, scoped, tag = 'input window, operand 1, single buffered']
    #allocation6 [shape = 's32[1]{0}', space=sflag, size = 0x4, scoped, tag = 'scoped memory for tpu_custom_call.1']
    #allocation7 [shape = 'u8[16384]{0}', space=vmem, size = 0x4000, scoped, tag = 'input window, operand 2, single buffered']
    #allocation8 [shape = 'u8[16384]{0}', space=vmem, size = 0x4000, scoped, tag = 'input window, operand 3, single buffered']
    #allocation9 [shape = 's32[1]{0}', space=sflag, size = 0x4, scoped, tag = 'scoped memory for tpu_custom_call.1']
    #allocation10 [shape = 'u8[16384]{0}', space=vmem, size = 0x4000, scoped, tag = 'output window, operand 0, single buffered']
    %9 = vsyncpa [#allocation3], 0
    %10 = vsyncpa [#allocation6], 0
    %11 = vsyncpa [#allocation9], 0
    %12 = vsyncpa [#allocation4], 0
    // Predicated region
    $region2: #{tpu_custom_call.1} parent=1 // pred_check
      _
    $region3: #{tpu_custom_call.1} parent=1 // pred_check_branch
      %14 = sbr.rel (0) target = $region5
    $region4: #{tpu_custom_call.1} parent=1 // pred_region
      %s16 = ssub.s32 64, 64
      %17 = vsyncadd [#allocation3], %s16
      %s19 = sshll.u32 [#allocation2], 4
      %s20 = int_to_ptr.vmem [resolvable:$true] %s19
      %22 = dma.hbm_to_vmem [thread:$0]  %s0, 64, %s20, [#allocation3]
    $region5: #{tpu_custom_call.1} parent=1 // pred_fallthru
      _
    // Predicated region
    $region6: #{tpu_custom_call.1} parent=1 // pred_check
      _
    $region7: #{tpu_custom_call.1} parent=1 // pred_check_branch
      %24 = sbr.rel (0) target = $region9
    $region8: #{tpu_custom_call.1} parent=1 // pred_region
      %s26 = ssub.s32 512, 512
      %27 = vsyncadd [#allocation6], %s26
      %s29 = sshll.u32 [#allocation5], 4
      %s30 = int_to_ptr.vmem [resolvable:$true] %s29
      %32 = dma.hbm_to_vmem [thread:$0]  %s1, 512, %s30, [#allocation6]
    $region9: #{tpu_custom_call.1} parent=1 // pred_fallthru
      _
    // Predicated region
    $region10: #{tpu_custom_call.1} parent=1 // pred_check
      _
    $region11: #{tpu_custom_call.1} parent=1 // pred_check_branch
      %34 = sbr.rel (0) target = $region13
    $region12: #{tpu_custom_call.1} parent=1 // pred_region
      %s36 = ssub.s32 512, 512
      %37 = vsyncadd [#allocation6], %s36
      %s39 = sshll.u32 [#allocation7], 4
      %s40 = int_to_ptr.vmem [resolvable:$true] %s39
      %42 = dma.hbm_to_vmem [thread:$0]  %s2, 512, %s40, [#allocation6]
    $region13: #{tpu_custom_call.1} parent=1 // pred_fallthru
      _
    // Predicated region
    $region14: #{tpu_custom_call.1} parent=1 // pred_check
      _
    $region15: #{tpu_custom_call.1} parent=1 // pred_check_branch
      %44 = sbr.rel (0) target = $region17
    $region16: #{tpu_custom_call.1} parent=1 // pred_region
      %s46 = ssub.s32 512, 512
      %47 = vsyncadd [#allocation9], %s46
      %s49 = sshll.u32 [#allocation8], 4
      %s50 = int_to_ptr.vmem [resolvable:$true] %s49
      %52 = dma.hbm_to_vmem [thread:$0]  %s3, 512, %s50, [#allocation9]
    $region17: #{tpu_custom_call.1} parent=1 // pred_fallthru
      _
    // Predicated region
    $region18: #{tpu_custom_call.1} parent=1 // pred_check
      _
    $region19: #{tpu_custom_call.1} parent=1 // pred_check_branch
      %54 = sbr.rel (0) target = $region21
    $region20: #{tpu_custom_call.1} parent=1 // pred_region
      %55 = dma.done [#allocation3], 64
    $region21: #{tpu_custom_call.1} parent=1 // pred_fallthru
      _
    // Predicated region
    $region22: #{tpu_custom_call.1} parent=1 // pred_check
      _
    $region23: #{tpu_custom_call.1} parent=1 // pred_check_branch
      %57 = sbr.rel (0) target = $region25
    $region24: #{tpu_custom_call.1} parent=1 // pred_region
      %58 = dma.done [#allocation6], 512
    $region25: #{tpu_custom_call.1} parent=1 // pred_fallthru
      _
    // Predicated region
    $region26: #{tpu_custom_call.1} parent=1 // pred_check
      _
    $region27: #{tpu_custom_call.1} parent=1 // pred_check_branch
      %60 = sbr.rel (0) target = $region29
    $region28: #{tpu_custom_call.1} parent=1 // pred_region
      %61 = dma.done [#allocation6], 512
    $region29: #{tpu_custom_call.1} parent=1 // pred_fallthru
      _
    // Predicated region
    $region30: #{tpu_custom_call.1} parent=1 // pred_check
      _
    $region31: #{tpu_custom_call.1} parent=1 // pred_check_branch
      %63 = sbr.rel (0) target = $region33
    $region32: #{tpu_custom_call.1} parent=1 // pred_region
      %64 = dma.done [#allocation9], 512
    $region33: #{tpu_custom_call.1} parent=1 // pred_fallthru
      _
    %v65 = vld [vmem:[#allocation5] sm:$0xff]
    %v66 = vld [vmem:[#allocation5 + $0x8] sm:$0xff]
    %v67 = vld [vmem:[#allocation5 + $0x10] sm:$0xff]
    %v68 = vld [vmem:[#allocation5 + $0x18] sm:$0xff]
    %v69 = vld [vmem:[#allocation7] sm:$0xff]
    %v70 = vld [vmem:[#allocation7 + $0x8] sm:$0xff]
    %v71 = vld [vmem:[#allocation7 + $0x10] sm:$0xff]
    %v72 = vld [vmem:[#allocation7 + $0x18] sm:$0xff]
    %v73 = vld [vmem:[#allocation8] sm:$0xff]
    %v74 = vld [vmem:[#allocation8 + $0x8] sm:$0xff]
    %v75 = vld [vmem:[#allocation8 + $0x10] sm:$0xff]
    %v76 = vld [vmem:[#allocation8 + $0x18] sm:$0xff]
    %v77 = vld [vmem:[#allocation2] sm:$0xf]
    %v79 = vlaneseq
    %v80 = vshrl.u32 %v79, 7
    %v81 = vsub.s32 0, %v80
    %v82 = vrot.slane %v77, %v81
    %v83 = vlaneseq
    %v84 = vshrl.u32 %v83, 7
    %v85 = vsub.s32 1, %v84
    %v86 = vrot.slane %v77, %v85
    %v87 = vlaneseq
    %v88 = vshrl.u32 %v87, 7
    %v89 = vsub.s32 2, %v88
    %v90 = vrot.slane %v77, %v89
    %v91 = vlaneseq
    %v92 = vshrl.u32 %v91, 7
    %v93 = vsub.s32 3, %v92
    %v94 = vrot.slane %v77, %v93
    %v99 = vmul.f32 %v65, %v82
    %v100 = vmul.f32 %v66, %v86
    %v101 = vmul.f32 %v67, %v90
    %v102 = vmul.f32 %v68, %v94
    %v103 = vadd.f32 %v99, %v100
    %v104 = vadd.f32 %v103, %v101
    %v105 = vadd.f32 %v104, %v102
    %106 = vadd.xlane.f32.xlu0 %v105
    %v107 = vpop.xlane.xlu0 %106
    %v108 = vmul.f32 %v69, %v82
    %v109 = vmul.f32 %v70, %v86
    %v110 = vmul.f32 %v71, %v90
    %v111 = vmul.f32 %v72, %v94
    %v112 = vadd.f32 %v108, %v109
    %v113 = vadd.f32 %v112, %v110
    %v114 = vadd.f32 %v113, %v111
    %115 = vadd.xlane.f32.xlu0 %v114
    %v116 = vpop.xlane.xlu0 %115
    %v117 = vmul.f32 %v73, %v82
    %v118 = vmul.f32 %v74, %v86
    %v119 = vmul.f32 %v75, %v90
    %v120 = vmul.f32 %v76, %v94
    %v121 = vadd.f32 %v117, %v118
    %v122 = vadd.f32 %v121, %v119
    %v123 = vadd.f32 %v122, %v120
    %124 = vadd.xlane.f32.xlu0 %v123
    %v125 = vpop.xlane.xlu0 %124
    %v126 = vmax.f32 %v107, %v116
    %v127 = vmax.f32 %v126, %v125
    %v128 = vsub.f32 %v107, %v127
    %v129 = vmul.f32 %v128, 1.442695
    %v130 = vpow.pop %v129
    %v131 = vsub.f32 %v116, %v127
    %v132 = vmul.f32 %v131, 1.442695
    %v133 = vpow.pop %v132
    %v134 = vsub.f32 %v125, %v127
    %v135 = vmul.f32 %v134, 1.442695
    %v136 = vpow.pop %v135
    %v137 = vadd.f32 %v130, %v133
    %v138 = vadd.f32 %v137, %v136
    %v139 = vrcp.pop %v138
    %v140 = vmul.f32 %v130, %v139
    %v141 = vmul.f32 %v133, %v139
    %v142 = vmul.f32 %v136, %v139
    %v143 = vmul.f32 %v140, %v65
    %v144 = vmul.f32 %v140, %v66
    %v145 = vmul.f32 %v140, %v67
    %v146 = vmul.f32 %v140, %v68
    %v147 = vmul.f32 %v141, %v69
    %v148 = vmul.f32 %v141, %v70
    %v149 = vmul.f32 %v141, %v71
    %v150 = vmul.f32 %v141, %v72
    %v151 = vadd.f32 %v143, %v147
    %v152 = vadd.f32 %v144, %v148
    %v153 = vadd.f32 %v145, %v149
    %v154 = vadd.f32 %v146, %v150
    %v155 = vmul.f32 %v142, %v73
    %v156 = vmul.f32 %v142, %v74
    %v157 = vmul.f32 %v142, %v75
    %v158 = vmul.f32 %v142, %v76
    %v159 = vadd.f32 %v151, %v155
    %v160 = vadd.f32 %v152, %v156
    %v161 = vadd.f32 %v153, %v157
    %v162 = vadd.f32 %v154, %v158
    %163 = vst [vmem:[#allocation10] sm:$0xff] %v159
    %164 = vst [vmem:[#allocation10 + $0x8] sm:$0xff] %v160
    %165 = vst [vmem:[#allocation10 + $0x10] sm:$0xff] %v161
    %166 = vst [vmem:[#allocation10 + $0x18] sm:$0xff] %v162
    // Predicated region
    $region34: #{tpu_custom_call.1} parent=1 // pred_check
      _
    $region35: #{tpu_custom_call.1} parent=1 // pred_check_branch
      %168 = sbr.rel (0) target = $region37
    $region36: #{tpu_custom_call.1} parent=1 // pred_region
      %s170 = ssub.s32 512, 512
      %171 = vsyncadd [#allocation4], %s170
      %s173 = sshll.u32 [#allocation10], 4
      %s174 = int_to_ptr.vmem [resolvable:$true] %s173
      %176 = dma.vmem_to_hbm [thread:$0]  %s174, 512, %s4, [#allocation4]
    $region37: #{tpu_custom_call.1} parent=1 // pred_fallthru
      _
    // Predicated region
    $region38: #{tpu_custom_call.1} parent=1 // pred_check
      _
    $region39: #{tpu_custom_call.1} parent=1 // pred_check_branch
      %178 = sbr.rel (0) target = $region41
    $region40: #{tpu_custom_call.1} parent=1 // pred_region
      %179 = dma.done [#allocation4], 512
    $region41: #{tpu_custom_call.1} parent=1 // pred_fallthru
      _
    %180 = vsyncpa [#allocation3], 1
    %181 = vsyncpa [#allocation6], 1
    %182 = vsyncpa [#allocation9], 1
    %183 = vsyncpa [#allocation4], 1

</llo_original>
